<compile_context>
chip_gen: v5e
topology: v5e:2x2
jax: 0.10.0
libtpu: 0.0.40
codegen_flags: <defaults>
</compile_context>

<pallas_src>
import functools

import jax
import jax.numpy as jnp
from jax.experimental import pallas as pl
from jax.experimental.pallas import tpu as pltpu

_LANE = 128


def _round_up(n: int, m: int) -> int:
    return ((n + m - 1) // m) * m


def _vmem_budget_bytes():
    """Returns (tiling budget, vmem_limit_bytes) derived from physical VMEM."""
    cap = 64 * 1024 * 1024  # conservative default == v7x per-TC VMEM
    try:
        cap = int(pltpu.get_tpu_info().vmem_capacity_bytes)
    except Exception:
        pass
    budget = min(int(cap * 0.80), 100 * 1024 * 1024)  # leave compiler headroom
    limit = min(int(cap * 0.90), 110 * 1024 * 1024)
    return budget, limit


def _vmem_resident(tm, d_pad, h_pad, w_itemsize, x_itemsize):
    """VMEM bytes for the weights-resident variant."""
    return (2 * 2 * tm * d_pad * x_itemsize                     # x / out tiles, double-buffered
            + (d_pad * h_pad + h_pad * d_pad) * w_itemsize      # w1 + w2, single buffer
            + (h_pad + d_pad) * 4                               # biases (upper bound)
            + tm * h_pad * 4                                    # f32 hidden activation
            + tm * d_pad * 4)                                   # f32 output accumulation


def _vmem_htiled(tm, th, d_pad, w_itemsize, x_itemsize):
    """VMEM bytes for the H-tiled (streaming-weights) variant."""
    return (2 * 2 * tm * d_pad * x_itemsize                     # x / out tiles, double-buffered
            + 2 * (d_pad * th + th + th * d_pad) * w_itemsize   # streamed w1/b1/w2, 2 buffers
            + d_pad * 4                                         # b2 (resident)
            + tm * d_pad * 4                                    # f32 accumulator scratch
            + tm * th * 4)                                      # f32 hidden activation


def _resident_spec(shape, index_map):
    # Constant-index blocks only need one VMEM buffer; the default pipeline
    # would double-buffer them (2x VMEM on the resident weights).
    try:
        return pl.BlockSpec(shape, index_map, pipeline_mode=pl.Buffered(1))
    except TypeError:  # older jax without pipeline_mode on BlockSpec
        return pl.BlockSpec(shape, index_map)


def _mlp_kernel_resident(x_ref, w1_ref, b1_ref, w2_ref, b2_ref, o_ref, *, mxu_dtype):
    # x_ref: (TM, D)  w1_ref: (D, H)  b1_ref: (1, H)  w2_ref: (H, D)  b2_ref: (1, D)
    x = x_ref[...].astype(mxu_dtype)
    h = jnp.dot(x, w1_ref[...], preferred_element_type=jnp.float32)
    h = h + b1_ref[...].astype(jnp.float32)
    h = h * jax.nn.sigmoid(h)                       # SiLU in f32 (sigmoid -> EUP slot)
    out = jnp.dot(h.astype(mxu_dtype), w2_ref[...], preferred_element_type=jnp.float32)
    out = out + b2_ref[...].astype(jnp.float32)
    o_ref[...] = out.astype(o_ref.dtype)


def _mlp_kernel_htiled(x_ref, w1_ref, b1_ref, w2_ref, b2_ref, o_ref, acc_ref, *, mxu_dtype):
    # Grid = (row tiles, hidden chunks); hidden axis is the reduction ("arbitrary", last).
    h_idx = pl.program_id(1)

    @pl.when(h_idx == 0)
    def _init():
        acc_ref[...] = jnp.zeros_like(acc_ref)

    x = x_ref[...].astype(mxu_dtype)
    h = jnp.dot(x, w1_ref[...], preferred_element_type=jnp.float32)
    h = h + b1_ref[...].astype(jnp.float32)
    h = h * jax.nn.sigmoid(h)
    acc_ref[...] += jnp.dot(h.astype(mxu_dtype), w2_ref[...],
                            preferred_element_type=jnp.float32)

    @pl.when(h_idx == pl.num_programs(1) - 1)
    def _finalize():
        o_ref[...] = (acc_ref[...] + b2_ref[...].astype(jnp.float32)).astype(o_ref.dtype)


@functools.partial(jax.jit,
                   static_argnames=("block_m", "use_bf16_matmul", "force_h_tiled"))
def multi_lr_mlp(x, w1, b1, w2, b2, *, block_m: int = 512,
                 use_bf16_matmul: bool = False, force_h_tiled: bool = False):
    """Forward pass of MultiLRMLP: fc1 -> SiLU -> fc2.

    x:  (..., dim)
    w1: (dim, dim_ff_hidden)    b1: (dim_ff_hidden,)
    w2: (dim_ff_hidden, dim)    b2: (dim,)
    """
    # TODO(synk): lr_scale / weight_decay gradient hooks are backward-only and
    # have no forward-pass equivalent to implement here.
    orig_shape = x.shape
    D = orig_shape[-1]
    H = w1.shape[1]
    xm = x.reshape(-1, D)
    M = xm.shape[0]

    dtype = x.dtype
    x_itemsize = jnp.dtype(dtype).itemsize
    mxu_dtype = dtype
    if use_bf16_matmul and dtype == jnp.float32:
        mxu_dtype = jnp.bfloat16                     # opt-in: ~3x MXU throughput on v6e/v7x
    w_itemsize = jnp.dtype(mxu_dtype).itemsize

    # Sublane packing per dtype (f32: 8, bf16: 16, int8/fp8: 32).
    sublane = {1: 32, 2: 16}.get(x_itemsize, 8)

    D_pad = _round_up(D, _LANE)
    H_pad = _round_up(H, _LANE)

    budget, vmem_limit = _vmem_budget_bytes()

    # Row tile: sublane-aligned, capped at block_m; keep >= 2 row tiles when M
    # allows so dimension_semantics=("parallel", ...) feeds both v7x cores.
    tm_cap = max(sublane, _round_up(pl.cdiv(M, 2), sublane))
    TM = min(_round_up(block_m, sublane), tm_cap)

    use_h_tiled = bool(force_h_tiled)
    TH = H_pad
    if force_h_tiled:
        TH = min(H_pad, _LANE)
    elif _vmem_resident(TM, D_pad, H_pad, w_itemsize, x_itemsize) > budget:
        # 1) auto-shrink TM to stay in the simple weights-resident fast path.
        tm_floor = min(TM, max(sublane, 128))
        tm_try = TM
        while (_vmem_resident(tm_try, D_pad, H_pad, w_itemsize, x_itemsize) > budget
               and tm_try > tm_floor):
            tm_try = max(_round_up(tm_try // 2, sublane), tm_floor)
        if _vmem_resident(tm_try, D_pad, H_pad, w_itemsize, x_itemsize) <= budget:
            TM = tm_try
        else:
            # 2) fall back to streaming the hidden dim with an f32 accumulator.
            use_h_tiled = True
            TM = min(TM, _round_up(256, sublane))
            th_floor = min(H_pad, 512)
            while (_vmem_htiled(TM, TH, D_pad, w_itemsize, x_itemsize) > budget
                   and TH > th_floor):
                TH = max(_round_up(TH // 2, _LANE), th_floor)
            while (_vmem_htiled(TM, TH, D_pad, w_itemsize, x_itemsize) > budget
                   and TM > sublane):
                TM = max(_round_up(TM // 2, sublane), sublane)

    if use_h_tiled:
        H_pad = _round_up(H_pad, TH)   # make TH divide H_pad (zero padding is inert)

    grid_m = pl.cdiv(M, TM)

    # Feature-dim (lane) padding only. No M padding: Pallas clips the ragged
    # last row tile and masks its store (rows are independent), so we avoid an
    # extra HBM round-trip over x and out.
    xm_p = xm if D_pad == D else jnp.pad(xm, ((0, 0), (0, D_pad - D)))
    w1_p = w1 if (D_pad == D and H_pad == H) else jnp.pad(w1, ((0, D_pad - D), (0, H_pad - H)))
    w2_p = w2 if (D_pad == D and H_pad == H) else jnp.pad(w2, ((0, H_pad - H), (0, D_pad - D)))
    b1_p = (b1 if H_pad == H else jnp.pad(b1, (0, H_pad - H))).reshape(1, H_pad)
    b2_p = (b2 if D_pad == D else jnp.pad(b2, (0, D_pad - D))).reshape(1, D_pad)
    if mxu_dtype != dtype:
        w1_p = w1_p.astype(mxu_dtype)
        w2_p = w2_p.astype(mxu_dtype)

    weight_bytes = ((D_pad * H_pad + H_pad * D_pad) * w_itemsize
                    + (H_pad + D_pad) * x_itemsize)
    cost = pl.CostEstimate(
        flops=4 * M * D_pad * H_pad,
        transcendentals=M * H_pad,
        bytes_accessed=2 * M * D_pad * x_itemsize
        + weight_bytes * (grid_m if use_h_tiled else 1),
    )
    compiler_params = pltpu.CompilerParams(
        dimension_semantics=(("parallel", "arbitrary") if use_h_tiled else ("parallel",)),
        vmem_limit_bytes=vmem_limit,
    )

    if not use_h_tiled:
        kernel = functools.partial(_mlp_kernel_resident, mxu_dtype=mxu_dtype)
        grid_spec = pltpu.PrefetchScalarGridSpec(
            num_scalar_prefetch=0,
            grid=(grid_m,),
            in_specs=[
                pl.BlockSpec((TM, D_pad), lambda i: (i, 0)),        # x tile (streamed)
                _resident_spec((D_pad, H_pad), lambda i: (0, 0)),   # w1 resident, 1 buffer
                _resident_spec((1, H_pad), lambda i: (0, 0)),       # b1 resident
                _resident_spec((H_pad, D_pad), lambda i: (0, 0)),   # w2 resident
                _resident_spec((1, D_pad), lambda i: (0, 0)),       # b2 resident
            ],
            out_specs=pl.BlockSpec((TM, D_pad), lambda i: (i, 0)),
        )
    else:
        grid_h = H_pad // TH
        kernel = functools.partial(_mlp_kernel_htiled, mxu_dtype=mxu_dtype)
        grid_spec = pltpu.PrefetchScalarGridSpec(
            num_scalar_prefetch=0,
            grid=(grid_m, grid_h),
            in_specs=[
                pl.BlockSpec((TM, D_pad), lambda i, h: (i, 0)),     # x tile (constant over h)
                pl.BlockSpec((D_pad, TH), lambda i, h: (0, h)),     # w1 chunk (streamed)
                pl.BlockSpec((1, TH), lambda i, h: (0, h)),         # b1 chunk (streamed)
                pl.BlockSpec((TH, D_pad), lambda i, h: (h, 0)),     # w2 chunk (streamed)
                _resident_spec((1, D_pad), lambda i, h: (0, 0)),    # b2 resident
            ],
            out_specs=pl.BlockSpec((TM, D_pad), lambda i, h: (i, 0)),
            scratch_shapes=[pltpu.VMEM((TM, D_pad), jnp.float32)],  # f32 accumulator
        )

    out = pl.pallas_call(
        kernel,
        out_shape=jax.ShapeDtypeStruct((M, D_pad), dtype),
        grid_spec=grid_spec,
        compiler_params=compiler_params,
        cost_estimate=cost,
    )(xm_p, w1_p, b1_p, w2_p, b2_p)

    if D_pad != D:
        out = out[:, :D]
    return out.reshape(orig_shape)


def init_params(key, dim, dim_ff_hidden, dtype=jnp.float32):
    """Deterministic init mimicking nn.Linear defaults (uniform +/- 1/sqrt(fan_in))."""
    k1, k2, k3, k4 = jax.random.split(key, 4)
    bound1 = 1.0 / (dim ** 0.5)
    bound2 = 1.0 / (dim_ff_hidden ** 0.5)
    # Stored as (in_features, out_features) so kernel does x @ W.
    w1 = jax.random.uniform(k1, (dim, dim_ff_hidden), dtype, -bound1, bound1)
    b1 = jax.random.uniform(k2, (dim_ff_hidden,), dtype, -bound1, bound1)
    w2 = jax.random.uniform(k3, (dim_ff_hidden, dim), dtype, -bound2, bound2)
    b2 = jax.random.uniform(k4, (dim,), dtype, -bound2, bound2)
    return w1, b1, w2, b2


def _reference(x, w1, b1, w2, b2):
    h = x @ w1 + b1
    h = h * jax.nn.sigmoid(h)
    return h @ w2 + b2


if __name__ == "__main__":
    # Small shapes consistent with the module: (batch, seq, dim)
    batch, seq, dim, dim_ff_hidden = 2, 8, 32, 64

    key = jax.random.PRNGKey(0)
    kx, kp = jax.random.split(key)
    x = jax.random.normal(kx, (batch, seq, dim), jnp.float32)
    w1, b1, w2, b2 = init_params(kp, dim, dim_ff_hidden)

    out = jax.block_until_ready(multi_lr_mlp(x, w1, b1, w2, b2))
    ref = _reference(x, w1, b1, w2, b2)
    assert out.shape == x.shape
    assert jnp.allclose(out, ref, atol=1e-5, rtol=1e-5)

    # Also exercise the H-tiled fallback path (used when resident weights would
    # not fit VMEM, e.g. large dim_ff_hidden on v7x's 64 MiB per-core VMEM).
    w1b, b1b, w2b, b2b = init_params(jax.random.PRNGKey(1), dim, 384)
    out2 = jax.block_until_ready(
        multi_lr_mlp(x, w1b, b1b, w2b, b2b, force_h_tiled=True))
    ref2 = _reference(x, w1b, b1b, w2b, b2b)
    assert out2.shape == x.shape
    assert jnp.allclose(out2, ref2, atol=1e-4, rtol=1e-4)

    print("KERNEL_OK")
</pallas_src>

<mosaic_0001>
module attributes {stable_mosaic.version = 11 : i64} {
  func.func @_mlp_kernel_resident(%arg0: i32, %arg1: memref<8x128xf32, #tpu.memory_space<vmem>>, %arg2: memref<128x128xf32, #tpu.memory_space<vmem>>, %arg3: memref<1x128xf32, #tpu.memory_space<vmem>>, %arg4: memref<128x128xf32, #tpu.memory_space<vmem>>, %arg5: memref<1x128xf32, #tpu.memory_space<vmem>>, %arg6: memref<8x128xf32, #tpu.memory_space<vmem>>) attributes {dimension_semantics = [#tpu.dimension_semantics<parallel>], iteration_bounds = array<i64: 2>, scalar_prefetch = 0 : i64, scratch_operands = 0 : i64, tpu.core_type = #tpu.core_type<tc>, window_params = [{transform_indices = @transform_0, window_bounds = array<i64: 8, 128>}, {pipeline_mode = #tpu.pipeline_mode<synchronous>, transform_indices = @transform_1, window_bounds = array<i64: 128, 128>}, {pipeline_mode = #tpu.pipeline_mode<synchronous>, transform_indices = @transform_2, window_bounds = array<i64: 1, 128>}, {pipeline_mode = #tpu.pipeline_mode<synchronous>, transform_indices = @transform_3, window_bounds = array<i64: 128, 128>}, {pipeline_mode = #tpu.pipeline_mode<synchronous>, transform_indices = @transform_4, window_bounds = array<i64: 1, 128>}, {transform_indices = @transform_5, window_bounds = array<i64: 8, 128>}]} {
    %c0 = arith.constant 0 : index
    %c0_0 = arith.constant 0 : index
    %0 = vector.load %arg1[%c0, %c0_0] : memref<8x128xf32, #tpu.memory_space<vmem>>, vector<8x128xf32>
    %c0_1 = arith.constant 0 : index
    %c0_2 = arith.constant 0 : index
    %1 = vector.load %arg2[%c0_1, %c0_2] : memref<128x128xf32, #tpu.memory_space<vmem>>, vector<128x128xf32>
    %cst = arith.constant dense<0.000000e+00> : vector<8x128xf32>
    %2 = tpu.matmul %0, %1, %cst {dimension_numbers = #tpu.dot_dimension_numbers<[1], [0], [0], [1], [0, 0, 1, 1], [], []>} : vector<8x128xf32>, vector<128x128xf32>, vector<8x128xf32> -> vector<8x128xf32>
    %c0_3 = arith.constant 0 : index
    %c0_4 = arith.constant 0 : index
    %3 = vector.load %arg3[%c0_3, %c0_4] : memref<1x128xf32, #tpu.memory_space<vmem>>, vector<1x128xf32>
    %4 = vector.broadcast %3 : vector<1x128xf32> to vector<8x128xf32>
    %5 = arith.addf %2, %4 : vector<8x128xf32>
    %6 = arith.negf %5 : vector<8x128xf32>
    %7 = math.exp %6 : vector<8x128xf32>
    %cst_5 = arith.constant 1.000000e+00 : f32
    %8 = vector.broadcast %cst_5 : f32 to vector<8x128xf32>
    %9 = arith.addf %8, %7 : vector<8x128xf32>
    %10 = arith.divf %8, %9 : vector<8x128xf32>
    %11 = arith.mulf %5, %10 : vector<8x128xf32>
    %c0_6 = arith.constant 0 : index
    %c0_7 = arith.constant 0 : index
    %12 = vector.load %arg4[%c0_6, %c0_7] : memref<128x128xf32, #tpu.memory_space<vmem>>, vector<128x128xf32>
    %cst_8 = arith.constant dense<0.000000e+00> : vector<8x128xf32>
    %13 = tpu.matmul %11, %12, %cst_8 {dimension_numbers = #tpu.dot_dimension_numbers<[1], [0], [0], [1], [0, 0, 1, 1], [], []>} : vector<8x128xf32>, vector<128x128xf32>, vector<8x128xf32> -> vector<8x128xf32>
    %c0_9 = arith.constant 0 : index
    %c0_10 = arith.constant 0 : index
    %14 = vector.load %arg5[%c0_9, %c0_10] : memref<1x128xf32, #tpu.memory_space<vmem>>, vector<1x128xf32>
    %15 = vector.broadcast %14 : vector<1x128xf32> to vector<8x128xf32>
    %16 = arith.addf %13, %15 : vector<8x128xf32>
    %c0_11 = arith.constant 0 : index
    %c0_12 = arith.constant 0 : index
    %17 = vector.load %arg6[%c0_11, %c0_12] : memref<8x128xf32, #tpu.memory_space<vmem>>, vector<8x128xf32>
    tpu.vector_store %arg6[%c0_11, %c0_12], %16 {strides = array<i32>} : memref<8x128xf32, #tpu.memory_space<vmem>>, vector<8x128xf32>,
    return
  }
  func.func @transform_0(%arg0: i32) -> (i32, i32) {
    %c0_i32 = arith.constant 0 : i32
    %c0_i32_0 = arith.constant 0 : i32
    return %arg0, %c0_i32 : i32, i32
  }
  func.func @transform_1(%arg0: i32) -> (i32, i32) {
    %c0_i32 = arith.constant 0 : i32
    %c0_i32_0 = arith.constant 0 : i32
    %c0_i32_1 = arith.constant 0 : i32
    return %c0_i32, %c0_i32_0 : i32, i32
  }
  func.func @transform_2(%arg0: i32) -> (i32, i32) {
    %c0_i32 = arith.constant 0 : i32
    %c0_i32_0 = arith.constant 0 : i32
    %c0_i32_1 = arith.constant 0 : i32
    return %c0_i32, %c0_i32_0 : i32, i32
  }
  func.func @transform_3(%arg0: i32) -> (i32, i32) {
    %c0_i32 = arith.constant 0 : i32
    %c0_i32_0 = arith.constant 0 : i32
    %c0_i32_1 = arith.constant 0 : i32
    return %c0_i32, %c0_i32_0 : i32, i32
  }
  func.func @transform_4(%arg0: i32) -> (i32, i32) {
    %c0_i32 = arith.constant 0 : i32
    %c0_i32_0 = arith.constant 0 : i32
    %c0_i32_1 = arith.constant 0 : i32
    return %c0_i32, %c0_i32_0 : i32, i32
  }
  func.func @transform_5(%arg0: i32) -> (i32, i32) {
    %c0_i32 = arith.constant 0 : i32
    %c0_i32_0 = arith.constant 0 : i32
    return %arg0, %c0_i32 : i32, i32
  }
}

</mosaic_0001>

<llo_original>
// kernel: multi_lr_mlp.1
$region0: #{multi_lr_mlp.1}
  #allocation0 [shape = 'u32[]', space=smem, size = 0x4, offset = 0x4, fixed_abs, tag = 'smem constant byte address 0x4 - core index']
  #allocation1 [shape = 'u32[72,128]{1,0:T(1,128)}', space=vmem, size = 0x9000, scoped, tag = 'internal scratch']
  %s0 = inlined_call_operand.vmem [shape: f32[16,128], index: 0, kind: input, shape index: {}]
  %s1 = inlined_call_operand.vmem [shape: f32[128,128], index: 1, kind: input, shape index: {}]
  %s2 = inlined_call_operand.vmem [shape: f32[1,128], index: 2, kind: input, shape index: {}]
  %s3 = inlined_call_operand.vmem [shape: f32[128,128], index: 3, kind: input, shape index: {}]
  %s4 = inlined_call_operand.vmem [shape: f32[1,128], index: 4, kind: input, shape index: {}]
  %s5 = inlined_call_operand.vmem [shape: f32[16,128], index: 5, kind: output, shape index: {}]
  %s6 = sld [smem:[#allocation0]]
  $region53: #{multi_lr_mlp.1} parent=0
    _
  %s8 = ssub.s32 1, %s6
  %s9 = scalar_select 0, %s8, %s6
  loop: start=0, step=1, limit=4
  $region2: #{multi_lr_mlp.1} parent=0 // loop_pre_header
    _
  $region3: #{multi_lr_mlp.1} parent=0 // loop_header
    %s11 = sphi 0, %s15
    %p12 = scmp.ge.s32.totalorder %s11, 4
    %s21 = sphi 0, %s23
    %s24 = sphi 0, %s21
    %s25 = sphi 0, %s24
    %s41 = sphi 0, %s25
    %s45 = sphi 0, %s45
    %s47 = sphi 0, %s45
    %s48 = sphi 0, %s47
    %s62 = sphi 0, %s48
    %s66 = sphi 0, %s66
    %s68 = sphi 0, %s66
    %s69 = sphi 0, %s68
    %s83 = sphi 0, %s69
    %s87 = sphi 0, %s87
    %s89 = sphi 0, %s87
    %s90 = sphi 0, %s89
    %s104 = sphi 0, %s90
    %s108 = sphi 0, %s108
    %s110 = sphi 0, %s108
    %s111 = sphi 0, %s110
    %s125 = sphi 0, %s111
    %s131 = sphi 0, %s133
    %s134 = sphi 0, %s131
    %s135 = sphi 0, %s134
    %s151 = sphi 0, %s135
  $region4: #{multi_lr_mlp.1} parent=0 // loop_header_branch
    %14 = sbr.rel (%p12) target = $region8
  $region5: #{multi_lr_mlp.1} parent=0 // loop_body
    %s16 = ssub.s32 %s11, 1
    %s17 = ssub.s32 %s11, 2
    %s18 = sadd.s32 %s11, 1
    %s19 = ssub.s32 %s11, %s18
    %p20 = scmp.eq.s32.totalorder %s19, 0
    %s22 = sadd.s32 %s21, 1
    %s23 = scalar_select %p20, %s21, %s22
    %p26 = pneg %p20
    %p27 = scmp.eq.s32.totalorder %s11, 1
    %p28 = por %p26, %p27
    %p29 = scmp.ne.s32.totalorder %s21, %s24
    %p30 = scmp.eq.s32.totalorder %s11, 0
    %p31 = por %p29, %p30
    %p32 = scmp.ne.s32.totalorder %s21, %s24
    %p33 = scmp.eq.s32.totalorder %s16, 1
    %p34 = por %p32, %p33
    %p35 = scmp.ne.s32.totalorder %s24, %s25
    %p36 = scmp.eq.s32.totalorder %s16, 0
    %p37 = por %p35, %p36
    %p38 = scmp.ne.s32.totalorder %s24, %s25
    %p39 = scmp.eq.s32.totalorder %s17, 1
    %p40 = por %p38, %p39
    %p42 = scmp.ne.s32.totalorder %s25, %s41
    %p43 = scmp.eq.s32.totalorder %s17, 0
    %p44 = por %p42, %p43
    %s46 = sadd.s32 %s45, 1
    %p49 = scmp.eq.s32.totalorder %s11, 1
    %p50 = scmp.ne.s32.totalorder %s45, %s47
    %p51 = scmp.eq.s32.totalorder %s11, 0
    %p52 = por %p50, %p51
    %p53 = scmp.ne.s32.totalorder %s45, %s47
    %p54 = scmp.eq.s32.totalorder %s16, 1
    %p55 = por %p53, %p54
    %p56 = scmp.ne.s32.totalorder %s47, %s48
    %p57 = scmp.eq.s32.totalorder %s16, 0
    %p58 = por %p56, %p57
    %p59 = scmp.ne.s32.totalorder %s47, %s48
    %p60 = scmp.eq.s32.totalorder %s17, 1
    %p61 = por %p59, %p60
    %p63 = scmp.ne.s32.totalorder %s48, %s62
    %p64 = scmp.eq.s32.totalorder %s17, 0
    %p65 = por %p63, %p64
    %s67 = sadd.s32 %s66, 1
    %p70 = scmp.eq.s32.totalorder %s11, 1
    %p71 = scmp.ne.s32.totalorder %s66, %s68
    %p72 = scmp.eq.s32.totalorder %s11, 0
    %p73 = por %p71, %p72
    %p74 = scmp.ne.s32.totalorder %s66, %s68
    %p75 = scmp.eq.s32.totalorder %s16, 1
    %p76 = por %p74, %p75
    %p77 = scmp.ne.s32.totalorder %s68, %s69
    %p78 = scmp.eq.s32.totalorder %s16, 0
    %p79 = por %p77, %p78
    %p80 = scmp.ne.s32.totalorder %s68, %s69
    %p81 = scmp.eq.s32.totalorder %s17, 1
    %p82 = por %p80, %p81
    %p84 = scmp.ne.s32.totalorder %s69, %s83
    %p85 = scmp.eq.s32.totalorder %s17, 0
    %p86 = por %p84, %p85
    %s88 = sadd.s32 %s87, 1
    %p91 = scmp.eq.s32.totalorder %s11, 1
    %p92 = scmp.ne.s32.totalorder %s87, %s89
    %p93 = scmp.eq.s32.totalorder %s11, 0
    %p94 = por %p92, %p93
    %p95 = scmp.ne.s32.totalorder %s87, %s89
    %p96 = scmp.eq.s32.totalorder %s16, 1
    %p97 = por %p95, %p96
    %p98 = scmp.ne.s32.totalorder %s89, %s90
    %p99 = scmp.eq.s32.totalorder %s16, 0
    %p100 = por %p98, %p99
    %p101 = scmp.ne.s32.totalorder %s89, %s90
    %p102 = scmp.eq.s32.totalorder %s17, 1
    %p103 = por %p101, %p102
    %p105 = scmp.ne.s32.totalorder %s90, %s104
    %p106 = scmp.eq.s32.totalorder %s17, 0
    %p107 = por %p105, %p106
    %s109 = sadd.s32 %s108, 1
    %p112 = scmp.eq.s32.totalorder %s11, 1
    %p113 = scmp.ne.s32.totalorder %s108, %s110
    %p114 = scmp.eq.s32.totalorder %s11, 0
    %p115 = por %p113, %p114
    %p116 = scmp.ne.s32.totalorder %s108, %s110
    %p117 = scmp.eq.s32.totalorder %s16, 1
    %p118 = por %p116, %p117
    %p119 = scmp.ne.s32.totalorder %s110, %s111
    %p120 = scmp.eq.s32.totalorder %s16, 0
    %p121 = por %p119, %p120
    %p122 = scmp.ne.s32.totalorder %s110, %s111
    %p123 = scmp.eq.s32.totalorder %s17, 1
    %p124 = por %p122, %p123
    %p126 = scmp.ne.s32.totalorder %s111, %s125
    %p127 = scmp.eq.s32.totalorder %s17, 0
    %p128 = por %p126, %p127
    %s129 = ssub.s32 %s11, %s18
    %p130 = scmp.eq.s32.totalorder %s129, 0
    %s132 = sadd.s32 %s131, 1
    %s133 = scalar_select %p130, %s131, %s132
    %p136 = pneg %p130
    %p137 = scmp.eq.s32.totalorder %s11, 1
    %p138 = por %p136, %p137
    %p139 = scmp.ne.s32.totalorder %s131, %s134
    %p140 = scmp.eq.s32.totalorder %s11, 0
    %p141 = por %p139, %p140
    %p142 = scmp.ne.s32.totalorder %s131, %s134
    %p143 = scmp.eq.s32.totalorder %s16, 1
    %p144 = por %p142, %p143
    %p145 = scmp.ne.s32.totalorder %s134, %s135
    %p146 = scmp.eq.s32.totalorder %s16, 0
    %p147 = por %p145, %p146
    %p148 = scmp.ne.s32.totalorder %s134, %s135
    %p149 = scmp.eq.s32.totalorder %s17, 1
    %p150 = por %p148, %p149
    %p152 = scmp.ne.s32.totalorder %s135, %s151
    %p153 = scmp.eq.s32.totalorder %s17, 0
    %p154 = por %p152, %p153
    %p155 = scmp.le.s32.totalorder 1, %s11
    %p156 = scmp.lt.s32.totalorder %s11, 3
    %p157 = pnand %p155, %p156
    %p158 = pneg %p157
    // Predicated region
    $region9: #{multi_lr_mlp.1} parent=5 // pred_check
      _
    $region10: #{multi_lr_mlp.1} parent=5 // pred_check_branch
      %160 = sbr.rel (%p157) target = $region12
    $region11: #{multi_lr_mlp.1} parent=5 // pred_region
      %s161 = ssub.s32 %s11, 1
      // Predicated region
      $region13: #{multi_lr_mlp.1} parent=11 // pred_check
        %p162 = pneg %p58
      $region14: #{multi_lr_mlp.1} parent=11 // pred_check_branch
        %164 = sbr.rel (%p162) target = $region16
      $region15: #{multi_lr_mlp.1} parent=11 // pred_region
        _
      $region16: #{multi_lr_mlp.1} parent=11 // pred_fallthru
        _
      // Predicated region
      $region17: #{multi_lr_mlp.1} parent=11 // pred_check
        %p165 = pneg %p79
      $region18: #{multi_lr_mlp.1} parent=11 // pred_check_branch
        %167 = sbr.rel (%p165) target = $region20
      $region19: #{multi_lr_mlp.1} parent=11 // pred_region
        _
      $region20: #{multi_lr_mlp.1} parent=11 // pred_fallthru
        _
      // Predicated region
      $region21: #{multi_lr_mlp.1} parent=11 // pred_check
        %p168 = pneg %p100
      $region22: #{multi_lr_mlp.1} parent=11 // pred_check_branch
        %170 = sbr.rel (%p168) target = $region24
      $region23: #{multi_lr_mlp.1} parent=11 // pred_region
        _
      $region24: #{multi_lr_mlp.1} parent=11 // pred_fallthru
        _
      // Predicated region
      $region25: #{multi_lr_mlp.1} parent=11 // pred_check
        %p171 = pneg %p121
      $region26: #{multi_lr_mlp.1} parent=11 // pred_check_branch
        %173 = sbr.rel (%p171) target = $region28
      $region27: #{multi_lr_mlp.1} parent=11 // pred_region
        _
      $region28: #{multi_lr_mlp.1} parent=11 // pred_fallthru
        _
    $region12: #{multi_lr_mlp.1} parent=5 // pred_fallthru
      _
    %p174 = scmp.lt.s32.totalorder %s11, 2
    // Predicated region
    $region29: #{multi_lr_mlp.1} parent=5 // pred_check
      %p175 = pneg %p174
    $region30: #{multi_lr_mlp.1} parent=5 // pred_check_branch
      %177 = sbr.rel (%p175) target = $region32
    $region31: #{multi_lr_mlp.1} parent=5 // pred_region
      // Predicated region
      $region33: #{multi_lr_mlp.1} parent=31 // pred_check
        %p178 = pneg %p31
      $region34: #{multi_lr_mlp.1} parent=31 // pred_check_branch
        %180 = sbr.rel (%p178) target = $region36
      $region35: #{multi_lr_mlp.1} parent=31 // pred_region
        %p181 = scmp.lt.s32.totalorder %s11, 1
        %s182 = scalar_select %p181, %s11, 1
        %s183 = smul.addr %s182, 8
        %s184 = scalar_lea.vmem %s0, %s183
      $region36: #{multi_lr_mlp.1} parent=31 // pred_fallthru
        _
    $region32: #{multi_lr_mlp.1} parent=5 // pred_fallthru
      _
    %p185 = scmp.le.s32.totalorder 1, %s11
    %p186 = scmp.lt.s32.totalorder %s11, 3
    %p187 = pnand %p185, %p186
    %p188 = pneg %p187
    // Predicated region
    $region37: #{multi_lr_mlp.1} parent=5 // pred_check
      _
    $region38: #{multi_lr_mlp.1} parent=5 // pred_check_branch
      %190 = sbr.rel (%p187) target = $region40
    $region39: #{multi_lr_mlp.1} parent=5 // pred_region
      %s191 = ssub.s32 %s11, 1
      %p192 = scmp.lt.s32.totalorder %s16, 1
      %s193 = scalar_select %p192, %s16, 1
      %s194 = smul.addr %s193, 8
      %s195 = scalar_lea.vmem %s0, %s194
      %p196 = pneg %p37
      %p197 = pneg %p34
      %p198 = pneg %p58
      %p199 = pneg %p55
      %p200 = pneg %p79
      %p201 = pneg %p76
      %p202 = pneg %p100
      %p203 = pneg %p97
      %p204 = pneg %p121
      %p205 = pneg %p118
      %p206 = pneg %p147
      %p207 = pneg %p144
      %p208 = scmp.lt.s32.totalorder %s16, 1
      %s209 = scalar_select %p208, %s16, 1
      %s210 = smul.addr %s209, 8
      %s211 = scalar_lea.vmem %s5, %s210
      %p212 = scmp.lt.s32.totalorder %s16, 1
      %s213 = scalar_select %p212, %s16, 1
      %s214 = smul.addr %s213, 8
      %s215 = scalar_lea.vmem %s0, %s214
      %p216 = scmp.lt.s32.totalorder %s16, 1
      %s217 = scalar_select %p216, %s16, 1
      %s218 = smul.addr %s217, 8
      %s219 = scalar_lea.vmem %s5, %s218
      %v220 = vld [vmem:[%s215] sm:$0xff]
      %v221 = vld [vmem:[%s1] sm:$0xff]
      %v222 = vld [vmem:[%s1 + $0x8] sm:$0xff]
      %v223 = vld [vmem:[%s1 + $0x10] sm:$0xff]
      %v224 = vld [vmem:[%s1 + $0x18] sm:$0xff]
      %v225 = vld [vmem:[%s1 + $0x20] sm:$0xff]
      %v226 = vld [vmem:[%s1 + $0x28] sm:$0xff]
      %v227 = vld [vmem:[%s1 + $0x30] sm:$0xff]
      %v228 = vld [vmem:[%s1 + $0x38] sm:$0xff]
      %v229 = vld [vmem:[%s1 + $0x40] sm:$0xff]
      %v230 = vld [vmem:[%s1 + $0x48] sm:$0xff]
      %v231 = vld [vmem:[%s1 + $0x50] sm:$0xff]
      %v232 = vld [vmem:[%s1 + $0x58] sm:$0xff]
      %v233 = vld [vmem:[%s1 + $0x60] sm:$0xff]
      %v234 = vld [vmem:[%s1 + $0x68] sm:$0xff]
      %v235 = vld [vmem:[%s1 + $0x70] sm:$0xff]
      %v236 = vld [vmem:[%s1 + $0x78] sm:$0xff]
      %v237 = vld [vmem:[%s2] sm:$0x1]
      %v239 = vperm.slane %v237, 0
      %241 = vmatpush.msra.mxu0 %v236
      %242 = vmatpush.msra.mxu0 %v235
      %243 = vmatpush.msra.mxu0 %v234
      %244 = vmatpush.msra.mxu0 %v233
      %245 = vmatpush.msra.mxu0 %v232
      %246 = vmatpush.msra.mxu0 %v231
      %247 = vmatpush.msra.mxu0 %v230
      %248 = vmatpush.msra.mxu0 %v229
      %249 = vmatpush.msra.mxu0 %v228
      %250 = vmatpush.msra.mxu0 %v227
      %251 = vmatpush.msra.mxu0 %v226
      %252 = vmatpush.msra.mxu0 %v225
      %253 = vmatpush.msra.mxu0 %v224
      %254 = vmatpush.msra.mxu0 %v223
      %255 = vmatpush.msra.mxu0 %v222
      %256 = vmatpush.msra.mxu0 %v221
      %257 = vmatmul.f32.gmra.mxu0 %v220
      %v258 = vpop.f32.mrf.mxu0
      %v259 = vadd.f32 %v239, %v258
      %260 = vdwg.mxu0
      %v261 = vxor.u32 %v259, 2147483648
      %v262 = vmul.f32 %v261, 1.442695
      %v263 = vpow.pop %v262
      %v264 = vadd.f32 %v263, 1.0
      %v265 = vrcp.pop %v264
      %v266 = vmul.f32 %v264, %v265
      %v267 = vsub.f32 1.0, %v266
      %v268 = vmul.f32 %v265, %v267
      %v269 = vadd.f32 %v265, %v268
      %vm270 = vweird.f32 %v264
      %vm271 = vweird.f32 %v265
      %vm272 = vmor %vm270, %vm271
      %v273 = vsel %vm272, %v265, %v269
      %v274 = vand.u32 2147483647, %v264
      %vm275 = vcmp.eq.f32.partialorder %v274, 8.507059e+37
      %v276 = vand.u32 %v264, 2147483648
      %v277 = vor.u32 1.1754944e-38, %v276
      %v278 = vsel %vm275, %v277, %v273
      %v279 = vmul.f32 1.0, %v278
      %v280 = vmul.f32 %v259, %v279
      %v281 = vld [vmem:[%s3] sm:$0xff]
      %v282 = vld [vmem:[%s3 + $0x8] sm:$0xff]
      %v283 = vld [vmem:[%s3 + $0x10] sm:$0xff]
      %v284 = vld [vmem:[%s3 + $0x18] sm:$0xff]
      %v285 = vld [vmem:[%s3 + $0x20] sm:$0xff]
      %v286 = vld [vmem:[%s3 + $0x28] sm:$0xff]
      %v287 = vld [vmem:[%s3 + $0x30] sm:$0xff]
      %v288 = vld [vmem:[%s3 + $0x38] sm:$0xff]
      %v289 = vld [vmem:[%s3 + $0x40] sm:$0xff]
      %v290 = vld [vmem:[%s3 + $0x48] sm:$0xff]
      %v291 = vld [vmem:[%s3 + $0x50] sm:$0xff]
      %v292 = vld [vmem:[%s3 + $0x58] sm:$0xff]
      %v293 = vld [vmem:[%s3 + $0x60] sm:$0xff]
      %v294 = vld [vmem:[%s3 + $0x68] sm:$0xff]
      %v295 = vld [vmem:[%s3 + $0x70] sm:$0xff]
      %v296 = vld [vmem:[%s3 + $0x78] sm:$0xff]
      %v297 = vld [vmem:[%s4] sm:$0x1]
      %v299 = vperm.slane %v297, 0
      %301 = vmatpush.msra.mxu0 %v296
      %302 = vmatpush.msra.mxu0 %v295
      %303 = vmatpush.msra.mxu0 %v294
      %304 = vmatpush.msra.mxu0 %v293
      %305 = vmatpush.msra.mxu0 %v292
      %306 = vmatpush.msra.mxu0 %v291
      %307 = vmatpush.msra.mxu0 %v290
      %308 = vmatpush.msra.mxu0 %v289
      %309 = vmatpush.msra.mxu0 %v288
      %310 = vmatpush.msra.mxu0 %v287
      %311 = vmatpush.msra.mxu0 %v286
      %312 = vmatpush.msra.mxu0 %v285
      %313 = vmatpush.msra.mxu0 %v284
      %314 = vmatpush.msra.mxu0 %v283
      %315 = vmatpush.msra.mxu0 %v282
      %316 = vmatpush.msra.mxu0 %v281
      %317 = vmatmul.f32.gmra.mxu0 %v280
      %v318 = vpop.f32.mrf.mxu0
      %v319 = vadd.f32 %v299, %v318
      %320 = vdwg.mxu0
      %321 = vst [vmem:[%s219] sm:$0xff] %v319
      %p322 = scmp.lt.s32.totalorder %s16, 1
      %s323 = scalar_select %p322, %s16, 1
      %s324 = smul.addr %s323, 8
      %s325 = scalar_lea.vmem %s5, %s324
      // Predicated region
      $region41: #{multi_lr_mlp.1} parent=39 // pred_check
        %p326 = pneg %p144
      $region42: #{multi_lr_mlp.1} parent=39 // pred_check_branch
        %328 = sbr.rel (%p326) target = $region44
      $region43: #{multi_lr_mlp.1} parent=39 // pred_region
        _
      $region44: #{multi_lr_mlp.1} parent=39 // pred_fallthru
        _
    $region40: #{multi_lr_mlp.1} parent=5 // pred_fallthru
      _
    %p329 = scmp.le.s32.totalorder 2, %s11
    // Predicated region
    $region45: #{multi_lr_mlp.1} parent=5 // pred_check
      %p330 = pneg %p329
    $region46: #{multi_lr_mlp.1} parent=5 // pred_check_branch
      %332 = sbr.rel (%p330) target = $region48
    $region47: #{multi_lr_mlp.1} parent=5 // pred_region
      %s333 = ssub.s32 %s11, 2
      // Predicated region
      $region49: #{multi_lr_mlp.1} parent=47 // pred_check
        %p334 = pneg %p150
      $region50: #{multi_lr_mlp.1} parent=47 // pred_check_branch
        %336 = sbr.rel (%p334) target = $region52
      $region51: #{multi_lr_mlp.1} parent=47 // pred_region
        %p337 = scmp.lt.s32.totalorder %s17, 1
        %s338 = scalar_select %p337, %s17, 1
        %s339 = smul.addr %s338, 8
        %s340 = scalar_lea.vmem %s5, %s339
      $region52: #{multi_lr_mlp.1} parent=47 // pred_fallthru
        _
    $region48: #{multi_lr_mlp.1} parent=5 // pred_fallthru
      _
  $region6: #{multi_lr_mlp.1} parent=0 // loop_footer
    %s15 = sadd.s32 1, %s11
  $region7: #{multi_lr_mlp.1} parent=0 // loop_footer_branch
    %10 = sbr.rel target = $region3
  $region8: #{multi_lr_mlp.1} parent=0 // loop_exit
    _

</llo_original>
